<compile_context>
chip_gen: v5e
topology: v5e:2x2
jax: 0.10.0
libtpu: 0.0.40
codegen_flags: <defaults>
</compile_context>

<pallas_src>
import functools

import jax
import jax.numpy as jnp
from jax.experimental import pallas as pl
from jax.experimental.pallas import tpu as pltpu


def _round_up(x, m):
    return ((x + m - 1) // m) * m


def _choose_tile_b(B):
    """Batch tile: 16-sublane aligned (bf16 packing), up to 512 rows,
    preferring an exact divisor of B (no pad copy) and >=2 tiles for v7x."""
    if B <= 32:
        return _round_up(B, 16)
    max_tb = min(512, _round_up((B + 1) // 2, 16))
    for tb in range(max_tb, 15, -16):
        if B % tb == 0:
            return tb
    return max_tb


def _use_bf16_tanh():
    """bf16 EUP path exists on v6e/v7x; keep f32 tanh on v5e and older."""
    try:
        kind = jax.devices()[0].device_kind.lower()
    except Exception:  # pragma: no cover
        return False
    return ("v6" in kind) or ("v7" in kind)


# ----------------------------------------------------------------------------
# Pallas kernel: pooler + classifier head + per-tile cross-entropy partial sum
# ----------------------------------------------------------------------------
def lc_classifier_kernel(
    h_ref,       # (TB, H)    bf16  [CLS] hidden states (batch tile)
    wp_ref,      # (H, H)     bf16  pooler weight             (resident, 1-buffered)
    bp_ref,      # (1, H)     f32   pooler bias               (resident)
    w1_ref,      # (H, 256)   bf16  classifier layer-1 weight (resident)
    b1_ref,      # (1, 256)   f32   classifier layer-1 bias   (resident)
    w2_ref,      # (256, Cp)  bf16  classifier layer-2 weight (resident, C padded)
    b2_ref,      # (1, Cp)    f32   classifier layer-2 bias   (resident, C padded)
    lab_ref,     # (TB, 1)    i32   labels (padding rows = -1)
    logits_ref,  # (TB, Cp)   f32   output logits (lane-dense)
    loss_ref,    # (1, 1)     f32   SMEM: per-tile sum of per-sample CE loss
    *,
    num_classes,  # real C (lanes >= C are padding)
    bf16_tanh,    # static: compute pooler tanh in bf16 (v6e / v7x)
):
    h = h_ref[...]                                               # bf16 (TB, H)

    # BERT-style pooler: tanh(h_cls @ W_pool + b_pool); bf16 MXU, f32 accum.
    pre = jnp.dot(h, wp_ref[...], preferred_element_type=jnp.float32) + bp_ref[...]
    if bf16_tanh:
        pooled = jnp.tanh(pre.astype(jnp.bfloat16))              # bf16 EUP
    else:
        pooled = jnp.tanh(pre).astype(jnp.bfloat16)              # f32 EUP (v5e)

    # classifier = Linear(H,256) -> ReLU -> Dropout(eval: identity) -> Linear(256,C)
    hid = jnp.dot(pooled, w1_ref[...],
                  preferred_element_type=jnp.float32) + b1_ref[...]
    hid = jnp.maximum(hid, 0.0)
    logits = jnp.dot(hid.astype(jnp.bfloat16), w2_ref[...],
                     preferred_element_type=jnp.float32) + b2_ref[...]   # (TB, Cp)
    logits_ref[...] = logits

    # single-label CrossEntropyLoss, restricted to the real classes:
    #   loss_i = logsumexp(logits_i[:C]) - logits_i[label_i]
    col = jax.lax.broadcasted_iota(jnp.int32, logits.shape, 1)
    if num_classes != logits.shape[-1]:
        logits_m = jnp.where(col < num_classes, logits, jnp.float32(-1e30))
    else:
        logits_m = logits
    m = jnp.max(logits_m, axis=-1, keepdims=True)
    lse = m + jnp.log(jnp.sum(jnp.exp(logits_m - m), axis=-1, keepdims=True))

    labels = lab_ref[...]                                        # (TB, 1) i32
    picked = jnp.sum(jnp.where(col == labels, logits, 0.0), axis=-1, keepdims=True)
    # ignore_index-style mask; batch-padding rows carry label = -1 so they are
    # covered by the same predicate (no program_id row mask needed).
    per_sample = jnp.where(labels >= 0, lse - picked, 0.0)       # (TB, 1)

    # Scalar partial sum for this batch tile -> SMEM (no lane-starved vector store).
    loss_ref[0, 0] = jnp.sum(per_sample)


# ----------------------------------------------------------------------------
# Wrapper: padding, BlockSpecs / grid, VMEM budget, final mean reduction
# ----------------------------------------------------------------------------
def lc_classifier_pallas(h_cls, w_pool, b_pool, w1, b1, w2, b2, labels):
    B, H = h_cls.shape
    HID = w1.shape[1]
    C = w2.shape[1]

    Cpad = _round_up(C, 128)                   # lane-dense logits output
    TB = _choose_tile_b(B)                     # 16-sublane aligned batch tile
    B_pad = _round_up(B, TB)
    n_tiles = B_pad // TB

    # Skip the HBM pad copies whenever the tile divides the batch exactly.
    if B_pad != B:
        h_in = jnp.zeros((B_pad, H), h_cls.dtype).at[:B].set(h_cls)
        lab_in = jnp.full((B_pad, 1), -1, jnp.int32).at[:B, 0].set(labels.astype(jnp.int32))
    else:
        h_in = h_cls
        lab_in = labels.astype(jnp.int32).reshape(B, 1)
    if Cpad != C:
        w2_in = jnp.zeros((HID, Cpad), w2.dtype).at[:, :C].set(w2)
        b2_in = jnp.zeros((1, Cpad), b2.dtype).at[:, :C].set(b2)
    else:
        w2_in, b2_in = w2, b2

    bf16_tanh = _use_bf16_tanh()
    kernel = functools.partial(lc_classifier_kernel,
                               num_classes=C, bf16_tanh=bf16_tanh)

    # VMEM budget: weights (counted x2 as headroom even though Buffered(1)
    # keeps them single-buffered) + double-buffered activation/label/logit tiles.
    # TODO(synk): for very large H (>= 2048) on v7x, W_pool should be K-tiled
    # over H with an f32 accumulator instead of kept fully resident.
    weight_bytes = (H * H + H * HID + HID * Cpad) * 2 + (H + HID + Cpad) * 4
    act_bytes = 2 * (TB * H * 2 + TB * 4 + TB * Cpad * 4)
    vmem_limit = int(min(max(2 * weight_bytes + act_bytes + (8 << 20), 16 << 20),
                         64 << 20))

    def resident_spec(shape):
        # Constant index_map => block never changes; single buffer is enough.
        return pl.BlockSpec(shape, lambda i: (0,) * len(shape),
                            pipeline_mode=pl.Buffered(1))

    flops = 2 * B_pad * (H * H + H * HID + HID * Cpad)
    transcendentals = B_pad * (H + Cpad)
    bytes_accessed = (
        h_in.size * 2 + w_pool.size * 2 + b_pool.size * 4
        + w1.size * 2 + b1.size * 4 + w2_in.size * 2 + b2_in.size * 4
        + lab_in.size * 4 + B_pad * Cpad * 4 + n_tiles * 4)

    logits_pad, loss_parts = pl.pallas_call(
        kernel,
        out_shape=(
            jax.ShapeDtypeStruct((B_pad, Cpad), jnp.float32),
            jax.ShapeDtypeStruct((n_tiles, 1), jnp.float32),
        ),
        grid_spec=pltpu.PrefetchScalarGridSpec(
            num_scalar_prefetch=0,
            grid=(n_tiles,),
            in_specs=[
                pl.BlockSpec((TB, H), lambda i: (i, 0)),     # h_cls: pipelined tile
                resident_spec((H, H)),                       # W_pool (VMEM-resident)
                resident_spec((1, H)),                       # b_pool
                resident_spec((H, HID)),                     # W1
                resident_spec((1, HID)),                     # b1
                resident_spec((HID, Cpad)),                  # W2 (class-padded)
                resident_spec((1, Cpad)),                    # b2 (class-padded)
                pl.BlockSpec((TB, 1), lambda i: (i, 0)),     # labels tile
            ],
            out_specs=(
                pl.BlockSpec((TB, Cpad), lambda i: (i, 0)),  # lane-dense logits
                pl.BlockSpec((1, 1), lambda i: (i, 0),
                             memory_space=pltpu.MemorySpace.SMEM),  # per-tile loss sum
            ),
        ),
        compiler_params=pltpu.CompilerParams(
            dimension_semantics=("parallel",),
            vmem_limit_bytes=vmem_limit),
        cost_estimate=pl.CostEstimate(
            flops=flops, transcendentals=transcendentals,
            bytes_accessed=bytes_accessed),
    )(h_in, w_pool, b_pool, w1, b1, w2_in, b2_in, lab_in)

    logits = logits_pad if (B_pad == B and Cpad == C) else logits_pad[:B, :C]
    # CrossEntropyLoss reduction='mean' over non-ignored labels.
    denom = jnp.maximum(jnp.sum((labels >= 0).astype(jnp.float32)), 1.0)
    loss = jnp.sum(loss_parts) / denom
    return logits, loss


# ----------------------------------------------------------------------------
# Module wrapper (glue in plain JAX)
# ----------------------------------------------------------------------------
class LCSequenceClassifierPallas:
    """Deterministic, eval-mode re-implementation of LCSequenceClassifier.forward."""

    def __init__(self, num_classes, vocab_size, hidden_size, key):
        self.num_classes = num_classes
        self.vocab_size = vocab_size
        self.hidden_size = hidden_size
        k = jax.random.split(key, 7)
        s = 0.05
        # TODO(synk): the full HuggingFace transformer encoder is an external
        # black-box dependency (hf_model); stood in by a frozen embedding table
        # + BERT pooler, which is the part of the pipeline this module consumes.
        # TODO(synk): the [CLS] embedding gather could be fused into the kernel
        # via scalar-prefetched token ids + manual DMA gather from HBM.
        self.tok_emb = (jax.random.normal(k[0], (vocab_size, hidden_size), jnp.float32) * s
                        ).astype(jnp.bfloat16)
        self.w_pool = (jax.random.normal(k[1], (hidden_size, hidden_size), jnp.float32) * s
                       ).astype(jnp.bfloat16)
        self.b_pool = jax.random.normal(k[2], (1, hidden_size), jnp.float32) * s
        # classifier head owned by LCSequenceClassifier:
        self.w1 = (jax.random.normal(k[3], (hidden_size, 256), jnp.float32) * s
                   ).astype(jnp.bfloat16)
        self.b1 = jax.random.normal(k[4], (1, 256), jnp.float32) * s
        self.w2 = (jax.random.normal(k[5], (256, num_classes), jnp.float32) * s
                   ).astype(jnp.bfloat16)
        self.b2 = jax.random.normal(k[6], (1, num_classes), jnp.float32) * s

    def forward(self, input_ids, attention_mask=None, labels=None):
        # attention_mask is unused on the CLS/pooler path (USE_MEAN_POOLING=False).
        del attention_mask
        # "transformer" stand-in: embedding lookup, take the [CLS] hidden state.
        h_cls = self.tok_emb[input_ids[:, 0]]                      # (B, H) bf16
        logits, loss = lc_classifier_pallas(
            h_cls, self.w_pool, self.b_pool,
            self.w1, self.b1, self.w2, self.b2,
            labels.astype(jnp.int32),
        )
        return {"loss": loss, "logits": logits}

    # pure-JAX reference (same bf16-matmul / f32-accumulate / tanh-path math)
    def forward_ref(self, input_ids, attention_mask=None, labels=None):
        h_cls = self.tok_emb[input_ids[:, 0]]
        pre = jnp.dot(h_cls, self.w_pool,
                      preferred_element_type=jnp.float32) + self.b_pool
        if _use_bf16_tanh():
            pooled = jnp.tanh(pre.astype(jnp.bfloat16))
        else:
            pooled = jnp.tanh(pre).astype(jnp.bfloat16)
        hid = jnp.maximum(
            jnp.dot(pooled, self.w1,
                    preferred_element_type=jnp.float32) + self.b1, 0.0)
        logits = jnp.dot(hid.astype(jnp.bfloat16), self.w2,
                         preferred_element_type=jnp.float32) + self.b2
        logz = jax.nn.logsumexp(logits, axis=-1)
        picked = jnp.take_along_axis(logits, labels[:, None], axis=-1)[:, 0]
        loss = jnp.mean(logz - picked)
        return {"loss": loss, "logits": logits}


if __name__ == "__main__":
    key = jax.random.PRNGKey(0)
    k_model, k_ids, k_lbl = jax.random.split(key, 3)

    batch, seq_len, vocab_size, hidden_size, num_classes = 2, 8, 64, 32, 4

    model = LCSequenceClassifierPallas(
        num_classes=num_classes, vocab_size=vocab_size,
        hidden_size=hidden_size, key=k_model,
    )

    input_ids = jax.random.randint(k_ids, (batch, seq_len), 0, vocab_size, dtype=jnp.int32)
    attention_mask = jnp.ones((batch, seq_len), dtype=jnp.int32)
    labels = jax.random.randint(k_lbl, (batch,), 0, num_classes, dtype=jnp.int32)

    out = model.forward(input_ids, attention_mask, labels)
    logits = jax.block_until_ready(out["logits"])
    loss = jax.block_until_ready(out["loss"])

    ref = model.forward_ref(input_ids, attention_mask, labels)
    assert jnp.allclose(logits, ref["logits"], atol=5e-3, rtol=5e-3), \
        (logits, ref["logits"])
    assert jnp.allclose(loss, ref["loss"], atol=5e-3, rtol=5e-3), (loss, ref["loss"])

    print("KERNEL_OK")
</pallas_src>

<mosaic_0001>
module attributes {stable_mosaic.version = 11 : i64} {
  func.func @lc_classifier_kernel(%arg0: i32, %arg1: memref<16x32xbf16, #tpu.memory_space<vmem>>, %arg2: memref<32x32xbf16, #tpu.memory_space<vmem>>, %arg3: memref<1x32xf32, #tpu.memory_space<vmem>>, %arg4: memref<32x256xbf16, #tpu.memory_space<vmem>>, %arg5: memref<1x256xf32, #tpu.memory_space<vmem>>, %arg6: memref<256x128xbf16, #tpu.memory_space<vmem>>, %arg7: memref<1x128xf32, #tpu.memory_space<vmem>>, %arg8: memref<16x1xi32, #tpu.memory_space<vmem>>, %arg9: memref<16x128xf32, #tpu.memory_space<vmem>>, %arg10: memref<1x1xf32, #tpu.memory_space<smem>>) attributes {dimension_semantics = [#tpu.dimension_semantics<parallel>], iteration_bounds = array<i64: 1>, scalar_prefetch = 0 : i64, scratch_operands = 0 : i64, tpu.core_type = #tpu.core_type<tc>, window_params = [{transform_indices = @transform_0, window_bounds = array<i64: 16, 32>}, {pipeline_mode = #tpu.pipeline_mode<synchronous>, transform_indices = @transform_1, window_bounds = array<i64: 32, 32>}, {pipeline_mode = #tpu.pipeline_mode<synchronous>, transform_indices = @transform_2, window_bounds = array<i64: 1, 32>}, {pipeline_mode = #tpu.pipeline_mode<synchronous>, transform_indices = @transform_3, window_bounds = array<i64: 32, 256>}, {pipeline_mode = #tpu.pipeline_mode<synchronous>, transform_indices = @transform_4, window_bounds = array<i64: 1, 256>}, {pipeline_mode = #tpu.pipeline_mode<synchronous>, transform_indices = @transform_5, window_bounds = array<i64: 256, 128>}, {pipeline_mode = #tpu.pipeline_mode<synchronous>, transform_indices = @transform_6, window_bounds = array<i64: 1, 128>}, {transform_indices = @transform_7, window_bounds = array<i64: 16, 1>}, {transform_indices = @transform_8, window_bounds = array<i64: 16, 128>}, {transform_indices = @transform_9, window_bounds = array<i64: 1, 1>}]} {
    %c0 = arith.constant 0 : index
    %c0_0 = arith.constant 0 : index
    %0 = vector.load %arg1[%c0, %c0_0] : memref<16x32xbf16, #tpu.memory_space<vmem>>, vector<16x32xbf16>
    %c0_1 = arith.constant 0 : index
    %c0_2 = arith.constant 0 : index
    %1 = vector.load %arg2[%c0_1, %c0_2] : memref<32x32xbf16, #tpu.memory_space<vmem>>, vector<32x32xbf16>
    %cst = arith.constant dense<0.000000e+00> : vector<16x32xf32>
    %2 = tpu.matmul %0, %1, %cst {dimension_numbers = #tpu.dot_dimension_numbers<[1], [0], [0], [1], [0, 0, 1, 1], [], []>} : vector<16x32xbf16>, vector<32x32xbf16>, vector<16x32xf32> -> vector<16x32xf32>
    %c0_3 = arith.constant 0 : index
    %c0_4 = arith.constant 0 : index
    %3 = vector.load %arg3[%c0_3, %c0_4] : memref<1x32xf32, #tpu.memory_space<vmem>>, vector<1x32xf32>
    %4 = vector.broadcast %3 : vector<1x32xf32> to vector<16x32xf32>
    %5 = arith.addf %2, %4 : vector<16x32xf32>
    %6 = math.tanh %5 : vector<16x32xf32>
    %7 = arith.truncf %6 : vector<16x32xf32> to vector<16x32xbf16>
    %c0_5 = arith.constant 0 : index
    %c0_6 = arith.constant 0 : index
    %8 = vector.load %arg4[%c0_5, %c0_6] : memref<32x256xbf16, #tpu.memory_space<vmem>>, vector<32x256xbf16>
    %cst_7 = arith.constant dense<0.000000e+00> : vector<16x256xf32>
    %9 = tpu.matmul %7, %8, %cst_7 {dimension_numbers = #tpu.dot_dimension_numbers<[1], [0], [0], [1], [0, 0, 1, 1], [], []>} : vector<16x32xbf16>, vector<32x256xbf16>, vector<16x256xf32> -> vector<16x256xf32>
    %c0_8 = arith.constant 0 : index
    %c0_9 = arith.constant 0 : index
    %10 = vector.load %arg5[%c0_8, %c0_9] : memref<1x256xf32, #tpu.memory_space<vmem>>, vector<1x256xf32>
    %11 = vector.broadcast %10 : vector<1x256xf32> to vector<16x256xf32>
    %12 = arith.addf %9, %11 : vector<16x256xf32>
    %cst_10 = arith.constant 0.000000e+00 : f32
    %13 = vector.broadcast %cst_10 : f32 to vector<16x256xf32>
    %14 = arith.maximumf %12, %13 : vector<16x256xf32>
    %15 = arith.truncf %14 : vector<16x256xf32> to vector<16x256xbf16>
    %c0_11 = arith.constant 0 : index
    %c0_12 = arith.constant 0 : index
    %16 = vector.load %arg6[%c0_11, %c0_12] : memref<256x128xbf16, #tpu.memory_space<vmem>>, vector<256x128xbf16>
    %cst_13 = arith.constant dense<0.000000e+00> : vector<16x128xf32>
    %17 = tpu.matmul %15, %16, %cst_13 {dimension_numbers = #tpu.dot_dimension_numbers<[1], [0], [0], [1], [0, 0, 1, 1], [], []>} : vector<16x256xbf16>, vector<256x128xbf16>, vector<16x128xf32> -> vector<16x128xf32>
    %c0_14 = arith.constant 0 : index
    %c0_15 = arith.constant 0 : index
    %18 = vector.load %arg7[%c0_14, %c0_15] : memref<1x128xf32, #tpu.memory_space<vmem>>, vector<1x128xf32>
    %19 = vector.broadcast %18 : vector<1x128xf32> to vector<16x128xf32>
    %20 = arith.addf %17, %19 : vector<16x128xf32>
    %c0_16 = arith.constant 0 : index
    %c0_17 = arith.constant 0 : index
    %21 = vector.load %arg9[%c0_16, %c0_17] : memref<16x128xf32, #tpu.memory_space<vmem>>, vector<16x128xf32>
    tpu.vector_store %arg9[%c0_16, %c0_17], %20 {strides = array<i32>} : memref<16x128xf32, #tpu.memory_space<vmem>>, vector<16x128xf32>,
    %22 = tpu.iota {dimensions = array<i32: 1>} : vector<16x128xi32>
    %c4_i32 = arith.constant 4 : i32
    %23 = vector.broadcast %c4_i32 : i32 to vector<16x128xi32>
    %24 = arith.cmpi slt, %22, %23 : vector<16x128xi32>
    %cst_18 = arith.constant -1.000000e+30 : f32
    %25 = vector.broadcast %cst_18 : f32 to vector<16x128xf32>
    %26 = arith.select %24, %20, %25 : vector<16x128xi1>, vector<16x128xf32>
    %cst_19 = arith.constant dense<0xFF800000> : vector<16xf32>
    %27 = vector.multi_reduction <maximumf>, %26, %cst_19 [1] : vector<16x128xf32> to vector<16xf32>
    %28 = vector.shape_cast %27 : vector<16xf32> to vector<16x1xf32>
    %29 = vector.broadcast %28 : vector<16x1xf32> to vector<16x128xf32>
    %30 = arith.subf %26, %29 : vector<16x128xf32>
    %31 = math.exp %30 : vector<16x128xf32>
    %cst_20 = arith.constant dense<0.000000e+00> : vector<16xf32>
    %32 = vector.multi_reduction <add>, %31, %cst_20 [1] : vector<16x128xf32> to vector<16xf32>
    %33 = vector.shape_cast %32 : vector<16xf32> to vector<16x1xf32>
    %34 = math.log %33 : vector<16x1xf32>
    %35 = arith.addf %28, %34 : vector<16x1xf32>
    %c0_21 = arith.constant 0 : index
    %c0_22 = arith.constant 0 : index
    %36 = vector.load %arg8[%c0_21, %c0_22] : memref<16x1xi32, #tpu.memory_space<vmem>>, vector<16x1xi32>
    %37 = vector.broadcast %36 : vector<16x1xi32> to vector<16x128xi32>
    %38 = arith.cmpi eq, %22, %37 : vector<16x128xi32>
    %cst_23 = arith.constant 0.000000e+00 : f32
    %39 = vector.broadcast %cst_23 : f32 to vector<16x128xf32>
    %40 = arith.select %38, %20, %39 : vector<16x128xi1>, vector<16x128xf32>
    %cst_24 = arith.constant dense<0.000000e+00> : vector<16xf32>
    %41 = vector.multi_reduction <add>, %40, %cst_24 [1] : vector<16x128xf32> to vector<16xf32>
    %42 = vector.shape_cast %41 : vector<16xf32> to vector<16x1xf32>
    %c0_i32 = arith.constant 0 : i32
    %43 = vector.broadcast %c0_i32 : i32 to vector<16x1xi32>
    %44 = arith.cmpi sge, %36, %43 : vector<16x1xi32>
    %45 = arith.subf %35, %42 : vector<16x1xf32>
    %cst_25 = arith.constant 0.000000e+00 : f32
    %46 = vector.broadcast %cst_25 : f32 to vector<16x1xf32>
    %47 = arith.select %44, %45, %46 : vector<16x1xi1>, vector<16x1xf32>
    %48 = vector.shape_cast %47 : vector<16x1xf32> to vector<1x16x1xf32>
    %cst_26 = arith.constant dense<0.000000e+00> : vector<1xf32>
    %49 = vector.multi_reduction <add>, %48, %cst_26 [1, 2] : vector<1x16x1xf32> to vector<1xf32>
    %50 = vector.shape_cast %49 : vector<1xf32> to vector<1x1x1xf32>
    %51 = vector.extract %50[0, 0, 0] : f32 from vector<1x1x1xf32>
    %c0_27 = arith.constant 0 : index
    %c0_28 = arith.constant 0 : index
    %52 = memref.load %arg10[%c0_27, %c0_28] : memref<1x1xf32, #tpu.memory_space<smem>>
    memref.store %51, %arg10[%c0_27, %c0_28] : memref<1x1xf32, #tpu.memory_space<smem>>
    return
  }
  func.func @transform_0(%arg0: i32) -> (i32, i32) {
    %c0_i32 = arith.constant 0 : i32
    %c0_i32_0 = arith.constant 0 : i32
    return %arg0, %c0_i32 : i32, i32
  }
  func.func @transform_1(%arg0: i32) -> (i32, i32) {
    %c0_i32 = arith.constant 0 : i32
    %c0_i32_0 = arith.constant 0 : i32
    %c0_i32_1 = arith.constant 0 : i32
    return %c0_i32, %c0_i32_0 : i32, i32
  }
  func.func @transform_2(%arg0: i32) -> (i32, i32) {
    %c0_i32 = arith.constant 0 : i32
    %c0_i32_0 = arith.constant 0 : i32
    %c0_i32_1 = arith.constant 0 : i32
    return %c0_i32, %c0_i32_0 : i32, i32
  }
  func.func @transform_3(%arg0: i32) -> (i32, i32) {
    %c0_i32 = arith.constant 0 : i32
    %c0_i32_0 = arith.constant 0 : i32
    %c0_i32_1 = arith.constant 0 : i32
    return %c0_i32, %c0_i32_0 : i32, i32
  }
  func.func @transform_4(%arg0: i32) -> (i32, i32) {
    %c0_i32 = arith.constant 0 : i32
    %c0_i32_0 = arith.constant 0 : i32
    %c0_i32_1 = arith.constant 0 : i32
    return %c0_i32, %c0_i32_0 : i32, i32
  }
  func.func @transform_5(%arg0: i32) -> (i32, i32) {
    %c0_i32 = arith.constant 0 : i32
    %c0_i32_0 = arith.constant 0 : i32
    %c0_i32_1 = arith.constant 0 : i32
    return %c0_i32, %c0_i32_0 : i32, i32
  }
  func.func @transform_6(%arg0: i32) -> (i32, i32) {
    %c0_i32 = arith.constant 0 : i32
    %c0_i32_0 = arith.constant 0 : i32
    %c0_i32_1 = arith.constant 0 : i32
    return %c0_i32, %c0_i32_0 : i32, i32
  }
  func.func @transform_7(%arg0: i32) -> (i32, i32) {
    %c0_i32 = arith.constant 0 : i32
    %c0_i32_0 = arith.constant 0 : i32
    return %arg0, %c0_i32 : i32, i32
  }
  func.func @transform_8(%arg0: i32) -> (i32, i32) {
    %c0_i32 = arith.constant 0 : i32
    %c0_i32_0 = arith.constant 0 : i32
    return %arg0, %c0_i32 : i32, i32
  }
  func.func @transform_9(%arg0: i32) -> (i32, i32) {
    %c0_i32 = arith.constant 0 : i32
    %c0_i32_0 = arith.constant 0 : i32
    return %arg0, %c0_i32 : i32, i32
  }
}

</mosaic_0001>

<llo_original>
// kernel: tpu_custom_call.1
$region0: #{tpu_custom_call.1}
  #allocation0 [shape = 'u32[]', space=smem, size = 0x4, offset = 0x4, fixed_abs, tag = 'smem constant byte address 0x4 - core index']
  #allocation1 [shape = 'u32[72,128]{1,0:T(1,128)}', space=vmem, size = 0x9000, scoped, tag = 'internal scratch']
  %s0 = inlined_call_operand.hbm [shape: bf16[16,32], index: 0, kind: input, shape index: {}]
  %s1 = inlined_call_operand.vmem [shape: bf16[32,32], index: 1, kind: input, shape index: {}]
  %s2 = inlined_call_operand.hbm [shape: f32[1,32], index: 2, kind: input, shape index: {}]
  %s3 = inlined_call_operand.hbm [shape: bf16[32,256], index: 3, kind: input, shape index: {}]
  %s4 = inlined_call_operand.vmem [shape: f32[1,256], index: 4, kind: input, shape index: {}]
  %s5 = inlined_call_operand.hbm [shape: bf16[256,128], index: 5, kind: input, shape index: {}]
  %s6 = inlined_call_operand.vmem [shape: f32[1,128], index: 6, kind: input, shape index: {}]
  %s7 = inlined_call_operand.vmem [shape: s32[16,1], index: 7, kind: input, shape index: {}]
  %s8 = inlined_call_operand.hbm [shape: f32[16,128], index: 8, kind: output, shape index: {0}]
  %s9 = inlined_call_operand.hbm [shape: f32[1,1], index: 9, kind: output, shape index: {1}]
  %10 = xla_tuple %s8, %s9
  %s11 = sld [smem:[#allocation0]]
  $region66: #{tpu_custom_call.1} parent=0
    _
  %s13 = ssub.s32 1, %s11
  %s14 = scalar_select 0, %s13, %s11
  $region1: #{tpu_custom_call.1} parent=0
    #allocation2 [shape = 'u8[4096]{0}', space=vmem, size = 0x1000, scoped, tag = 'input window, operand 0, single buffered']
    #allocation3 [shape = 's32[1]{0}', space=sflag, size = 0x4, scoped, tag = 'scoped memory for tpu_custom_call.1']
    #allocation4 [shape = 's32[1]{0}', space=sflag, size = 0x4, scoped, tag = 'scoped memory for tpu_custom_call.1']
    #allocation5 [shape = 's32[1]{0}', space=sflag, size = 0x4, scoped, tag = 'scoped memory for tpu_custom_call.1']
    #allocation6 [shape = 'u8[512]{0}', space=vmem, size = 0x400, scoped, tag = 'input window, operand 2, single buffered']
    #allocation7 [shape = 's32[1]{0}', space=sflag, size = 0x4, scoped, tag = 'scoped memory for tpu_custom_call.1']
    #allocation8 [shape = 'u8[16384]{0}', space=vmem, size = 0x4000, scoped, tag = 'input window, operand 3, single buffered']
    #allocation9 [shape = 'u8[65536]{0}', space=vmem, size = 0x10000, scoped, tag = 'input window, operand 5, single buffered']
    #allocation10 [shape = 's32[1]{0}', space=sflag, size = 0x4, scoped, tag = 'scoped memory for tpu_custom_call.1']
    #allocation11 [shape = 'u8[8192]{0}', space=vmem, size = 0x2000, scoped, tag = 'output window, operand 0, single buffered']
    #allocation12 [shape = 'u8[512]{0}', space=smem, size = 0x200, scoped, tag = 'output window, operand 1, single buffered']
    %15 = vsyncpa [#allocation3], 0
    %16 = vsyncpa [#allocation7], 0
    %17 = vsyncpa [#allocation10], 0
    %18 = vsyncpa [#allocation4], 0
    %19 = vsyncpa [#allocation5], 0
    // Predicated region
    $region2: #{tpu_custom_call.1} parent=1 // pred_check
      _
    $region3: #{tpu_custom_call.1} parent=1 // pred_check_branch
      %21 = sbr.rel (0) target = $region5
    $region4: #{tpu_custom_call.1} parent=1 // pred_region
      %23 = vsyncadd [#allocation3], 0
      %s24 = sshll.u32 %s0, 4
      %s25 = int_to_ptr.hbm [resolvable:$true] %s24
      %s26 = sshll.u32 [#allocation2], 4
      %s27 = int_to_ptr.vmem [resolvable:$true] %s26
      %32 = dma.hbm_to_vmem [thread:$0]  %s25, 128, %s27, [#allocation3], 64, 64, 4
    $region5: #{tpu_custom_call.1} parent=1 // pred_fallthru
      _
    // Predicated region
    $region6: #{tpu_custom_call.1} parent=1 // pred_check
      _
    $region7: #{tpu_custom_call.1} parent=1 // pred_check_branch
      %34 = sbr.rel (0) target = $region9
    $region8: #{tpu_custom_call.1} parent=1 // pred_region
      _
    $region9: #{tpu_custom_call.1} parent=1 // pred_fallthru
      _
    // Predicated region
    $region10: #{tpu_custom_call.1} parent=1 // pred_check
      _
    $region11: #{tpu_custom_call.1} parent=1 // pred_check_branch
      %36 = sbr.rel (0) target = $region13
    $region12: #{tpu_custom_call.1} parent=1 // pred_region
      %38 = vsyncadd [#allocation7], 0
      %s40 = sshll.u32 %s2, 4
      %s41 = int_to_ptr.hbm [resolvable:$true] %s40
      %s42 = sshll.u32 [#allocation6], 4
      %s43 = int_to_ptr.vmem [resolvable:$true] %s42
      %45 = dma.hbm_to_vmem [thread:$0]  %s41, 16, %s43, [#allocation7]
    $region13: #{tpu_custom_call.1} parent=1 // pred_fallthru
      _
    // Predicated region
    $region14: #{tpu_custom_call.1} parent=1 // pred_check
      _
    $region15: #{tpu_custom_call.1} parent=1 // pred_check_branch
      %47 = sbr.rel (0) target = $region17
    $region16: #{tpu_custom_call.1} parent=1 // pred_region
      %49 = vsyncadd [#allocation7], 0
      %s50 = sshll.u32 %s3, 4
      %s51 = int_to_ptr.hbm [resolvable:$true] %s50
      %s52 = sshll.u32 [#allocation8], 4
      %s53 = int_to_ptr.vmem [resolvable:$true] %s52
      %58 = dma.hbm_to_vmem [thread:$0]  %s51, 512, %s53, [#allocation7], 128, 128, 8
    $region17: #{tpu_custom_call.1} parent=1 // pred_fallthru
      _
    // Predicated region
    $region18: #{tpu_custom_call.1} parent=1 // pred_check
      _
    $region19: #{tpu_custom_call.1} parent=1 // pred_check_branch
      %60 = sbr.rel (0) target = $region21
    $region20: #{tpu_custom_call.1} parent=1 // pred_region
      _
    $region21: #{tpu_custom_call.1} parent=1 // pred_fallthru
      _
    // Predicated region
    $region22: #{tpu_custom_call.1} parent=1 // pred_check
      _
    $region23: #{tpu_custom_call.1} parent=1 // pred_check_branch
      %62 = sbr.rel (0) target = $region25
    $region24: #{tpu_custom_call.1} parent=1 // pred_region
      %64 = vsyncadd [#allocation10], 0
      %s65 = sshll.u32 %s5, 4
      %s66 = int_to_ptr.hbm [resolvable:$true] %s65
      %s67 = sshll.u32 [#allocation9], 4
      %s68 = int_to_ptr.vmem [resolvable:$true] %s67
      %73 = dma.hbm_to_vmem [thread:$0]  %s66, 2048, %s68, [#allocation10], 64, 64, 4
    $region25: #{tpu_custom_call.1} parent=1 // pred_fallthru
      _
    // Predicated region
    $region26: #{tpu_custom_call.1} parent=1 // pred_check
      _
    $region27: #{tpu_custom_call.1} parent=1 // pred_check_branch
      %75 = sbr.rel (0) target = $region29
    $region28: #{tpu_custom_call.1} parent=1 // pred_region
      _
    $region29: #{tpu_custom_call.1} parent=1 // pred_fallthru
      _
    // Predicated region
    $region30: #{tpu_custom_call.1} parent=1 // pred_check
      _
    $region31: #{tpu_custom_call.1} parent=1 // pred_check_branch
      %77 = sbr.rel (0) target = $region33
    $region32: #{tpu_custom_call.1} parent=1 // pred_region
      _
    $region33: #{tpu_custom_call.1} parent=1 // pred_fallthru
      _
    // Predicated region
    $region34: #{tpu_custom_call.1} parent=1 // pred_check
      _
    $region35: #{tpu_custom_call.1} parent=1 // pred_check_branch
      %79 = sbr.rel (0) target = $region37
    $region36: #{tpu_custom_call.1} parent=1 // pred_region
      %81 = dma.done [#allocation3], 128
    $region37: #{tpu_custom_call.1} parent=1 // pred_fallthru
      _
    // Predicated region
    $region38: #{tpu_custom_call.1} parent=1 // pred_check
      _
    $region39: #{tpu_custom_call.1} parent=1 // pred_check_branch
      %83 = sbr.rel (0) target = $region41
    $region40: #{tpu_custom_call.1} parent=1 // pred_region
      %85 = dma.done [#allocation7], 16
    $region41: #{tpu_custom_call.1} parent=1 // pred_fallthru
      _
    // Predicated region
    $region42: #{tpu_custom_call.1} parent=1 // pred_check
      _
    $region43: #{tpu_custom_call.1} parent=1 // pred_check_branch
      %87 = sbr.rel (0) target = $region45
    $region44: #{tpu_custom_call.1} parent=1 // pred_region
      %89 = dma.done [#allocation7], 512
    $region45: #{tpu_custom_call.1} parent=1 // pred_fallthru
      _
    // Predicated region
    $region46: #{tpu_custom_call.1} parent=1 // pred_check
      _
    $region47: #{tpu_custom_call.1} parent=1 // pred_check_branch
      %91 = sbr.rel (0) target = $region49
    $region48: #{tpu_custom_call.1} parent=1 // pred_region
      %93 = dma.done [#allocation10], 2048
    $region49: #{tpu_custom_call.1} parent=1 // pred_fallthru
      _
    %v95 = vld [vmem:[#allocation2] sm:$0xf]
    %v96 = vld [vmem:[#allocation2 + $0x4] sm:$0xf]
    %v97 = vld [vmem:[%s1] sm:$0xf]
    %v98 = vld [vmem:[%s1 + $0x4] sm:$0xf]
    %v99 = vld [vmem:[%s1 + $0x8] sm:$0xf]
    %v100 = vld [vmem:[%s1 + $0xc] sm:$0xf]
    %v101 = vld [vmem:[#allocation6] sm:$0x1]
    %v103 = vperm.slane %v101, 0
    %v107 = vunpack.c.l.b16 %v95
    %v108 = vunpack.c.l.b16 %v96
    %v109 = vpack.c.b16 %v108, %v107
    %v114 = vunpack.c.l.b16 %v97
    %v115 = vunpack.c.l.b16 %v98
    %v116 = vunpack.c.l.b16 %v99
    %v117 = vunpack.c.l.b16 %v100
    %v118 = vpack.c.b16 %v115, %v114
    %v119 = vpack.c.b16 %v117, %v116
    %vm122 = vcmask 261120
    %v124 = vsel %vm122, %v109, 0
    %126 = vmatpush.bf16.msra.mxu0 0
    %127 = vmatpush.bf16.msra.mxu0 0
    %128 = vmatpush.bf16.msra.mxu0 0
    %129 = vmatpush.bf16.msra.mxu0 0
    %130 = vmatpush.bf16.msra.mxu0 0
    %131 = vmatpush.bf16.msra.mxu0 0
    %132 = vmatpush.bf16.msra.mxu0 %v119
    %133 = vmatpush.bf16.msra.mxu0 %v118
    %134 = vmatmul.bf16.gmra.mxu0 %v124
    %v135 = vpop.f32.mrf.mxu0
    %v136 = vadd.f32 %v103, %v135
    %v137 = vpop.f32.mrf.mxu0
    %v138 = vadd.f32 %v103, %v137
    %139 = vdwg.mxu0
    %v140 = vtanh.pop %v136
    %v141 = vtanh.pop %v138
    %v142 = vpack.c.bf16 %v141, %v140
    %v143 = vld [vmem:[#allocation8] sm:$0xff]
    %v144 = vld [vmem:[#allocation8 + $0x8] sm:$0xff]
    %v145 = vld [vmem:[#allocation8 + $0x10] sm:$0xff]
    %v146 = vld [vmem:[#allocation8 + $0x18] sm:$0xff]
    %v147 = vld [vmem:[%s4] sm:$0x3]
    %v149 = vperm.slane %v147, 0
    %v150 = vperm.slane %v147, 1
    %v157 = vunpack.c.l.b16 %v143
    %v158 = vunpack.c.h.b16 %v143
    %v159 = vunpack.c.l.b16 %v144
    %v160 = vunpack.c.h.b16 %v144
    %v161 = vunpack.c.l.b16 %v145
    %v162 = vunpack.c.h.b16 %v145
    %v163 = vunpack.c.l.b16 %v146
    %v164 = vunpack.c.h.b16 %v146
    %v165 = vpack.c.b16 %v159, %v157
    %v166 = vpack.c.b16 %v160, %v158
    %v167 = vpack.c.b16 %v163, %v161
    %v168 = vpack.c.b16 %v164, %v162
    %v174 = vsel %vm122, %v142, 0
    %176 = vmatpush.bf16.msra.mxu0 0
    %177 = vmatpush.bf16.msra.mxu0 0
    %178 = vmatpush.bf16.msra.mxu0 0
    %179 = vmatpush.bf16.msra.mxu0 0
    %180 = vmatpush.bf16.msra.mxu0 0
    %181 = vmatpush.bf16.msra.mxu0 0
    %182 = vmatpush.bf16.msra.mxu0 %v167
    %183 = vmatpush.bf16.msra.mxu0 %v165
    %184 = vmatmul.bf16.gmra.mxu0 %v174
    %v185 = vpop.f32.mrf.mxu0
    %v186 = vadd.f32 %v149, %v185
    %v187 = vpop.f32.mrf.mxu0
    %v188 = vadd.f32 %v149, %v187
    %189 = vdwg.mxu0
    %190 = vmatpush.bf16.msra.mxu0 0
    %191 = vmatpush.bf16.msra.mxu0 0
    %192 = vmatpush.bf16.msra.mxu0 0
    %193 = vmatpush.bf16.msra.mxu0 0
    %194 = vmatpush.bf16.msra.mxu0 0
    %195 = vmatpush.bf16.msra.mxu0 0
    %196 = vmatpush.bf16.msra.mxu0 %v168
    %197 = vmatpush.bf16.msra.mxu0 %v166
    %198 = vmatmul.bf16.gmra.mxu0 %v174
    %v199 = vpop.f32.mrf.mxu0
    %v200 = vadd.f32 %v150, %v199
    %v201 = vpop.f32.mrf.mxu0
    %v202 = vadd.f32 %v150, %v201
    %203 = vdwg.mxu0
    %v204 = vmax.f32 %v186, 0.0
    %v205 = vmax.f32 %v200, 0.0
    %v206 = vmax.f32 %v188, 0.0
    %v207 = vmax.f32 %v202, 0.0
    %v208 = vpack.c.bf16 %v206, %v204
    %v209 = vpack.c.bf16 %v207, %v205
    %v210 = vld [vmem:[#allocation9] sm:$0xf]
    %v211 = vld [vmem:[#allocation9 + $0x4] sm:$0xf]
    %v212 = vld [vmem:[#allocation9 + $0x8] sm:$0xf]
    %v213 = vld [vmem:[#allocation9 + $0xc] sm:$0xf]
    %v214 = vld [vmem:[#allocation9 + $0x10] sm:$0xf]
    %v215 = vld [vmem:[#allocation9 + $0x14] sm:$0xf]
    %v216 = vld [vmem:[#allocation9 + $0x18] sm:$0xf]
    %v217 = vld [vmem:[#allocation9 + $0x1c] sm:$0xf]
    %v218 = vld [vmem:[#allocation9 + $0x20] sm:$0xf]
    %v219 = vld [vmem:[#allocation9 + $0x24] sm:$0xf]
    %v220 = vld [vmem:[#allocation9 + $0x28] sm:$0xf]
    %v221 = vld [vmem:[#allocation9 + $0x2c] sm:$0xf]
    %v222 = vld [vmem:[#allocation9 + $0x30] sm:$0xf]
    %v223 = vld [vmem:[#allocation9 + $0x34] sm:$0xf]
    %v224 = vld [vmem:[#allocation9 + $0x38] sm:$0xf]
    %v225 = vld [vmem:[#allocation9 + $0x3c] sm:$0xf]
    %v226 = vld [vmem:[#allocation9 + $0x40] sm:$0xf]
    %v227 = vld [vmem:[#allocation9 + $0x44] sm:$0xf]
    %v228 = vld [vmem:[#allocation9 + $0x48] sm:$0xf]
    %v229 = vld [vmem:[#allocation9 + $0x4c] sm:$0xf]
    %v230 = vld [vmem:[#allocation9 + $0x50] sm:$0xf]
    %v231 = vld [vmem:[#allocation9 + $0x54] sm:$0xf]
    %v232 = vld [vmem:[#allocation9 + $0x58] sm:$0xf]
    %v233 = vld [vmem:[#allocation9 + $0x5c] sm:$0xf]
    %v234 = vld [vmem:[#allocation9 + $0x60] sm:$0xf]
    %v235 = vld [vmem:[#allocation9 + $0x64] sm:$0xf]
    %v236 = vld [vmem:[#allocation9 + $0x68] sm:$0xf]
    %v237 = vld [vmem:[#allocation9 + $0x6c] sm:$0xf]
    %v238 = vld [vmem:[#allocation9 + $0x70] sm:$0xf]
    %v239 = vld [vmem:[#allocation9 + $0x74] sm:$0xf]
    %v240 = vld [vmem:[#allocation9 + $0x78] sm:$0xf]
    %v241 = vld [vmem:[#allocation9 + $0x7c] sm:$0xf]
    %v242 = vld [vmem:[%s6] sm:$0x1]
    %v244 = vperm.slane %v242, 0
    %v278 = vunpack.c.l.b16 %v210
    %v279 = vunpack.c.l.b16 %v211
    %v280 = vunpack.c.l.b16 %v212
    %v281 = vunpack.c.l.b16 %v213
    %v282 = vunpack.c.l.b16 %v214
    %v283 = vunpack.c.l.b16 %v215
    %v284 = vunpack.c.l.b16 %v216
    %v285 = vunpack.c.l.b16 %v217
    %v286 = vunpack.c.l.b16 %v218
    %v287 = vunpack.c.l.b16 %v219
    %v288 = vunpack.c.l.b16 %v220
    %v289 = vunpack.c.l.b16 %v221
    %v290 = vunpack.c.l.b16 %v222
    %v291 = vunpack.c.l.b16 %v223
    %v292 = vunpack.c.l.b16 %v224
    %v293 = vunpack.c.l.b16 %v225
    %v294 = vunpack.c.l.b16 %v226
    %v295 = vunpack.c.l.b16 %v227
    %v296 = vunpack.c.l.b16 %v228
    %v297 = vunpack.c.l.b16 %v229
    %v298 = vunpack.c.l.b16 %v230
    %v299 = vunpack.c.l.b16 %v231
    %v300 = vunpack.c.l.b16 %v232
    %v301 = vunpack.c.l.b16 %v233
    %v302 = vunpack.c.l.b16 %v234
    %v303 = vunpack.c.l.b16 %v235
    %v304 = vunpack.c.l.b16 %v236
    %v305 = vunpack.c.l.b16 %v237
    %v306 = vunpack.c.l.b16 %v238
    %v307 = vunpack.c.l.b16 %v239
    %v308 = vunpack.c.l.b16 %v240
    %v309 = vunpack.c.l.b16 %v241
    %v310 = vpack.c.b16 %v279, %v278
    %v311 = vpack.c.b16 %v281, %v280
    %v312 = vpack.c.b16 %v283, %v282
    %v313 = vpack.c.b16 %v285, %v284
    %v314 = vpack.c.b16 %v287, %v286
    %v315 = vpack.c.b16 %v289, %v288
    %v316 = vpack.c.b16 %v291, %v290
    %v317 = vpack.c.b16 %v293, %v292
    %v318 = vpack.c.b16 %v295, %v294
    %v319 = vpack.c.b16 %v297, %v296
    %v320 = vpack.c.b16 %v299, %v298
    %v321 = vpack.c.b16 %v301, %v300
    %v322 = vpack.c.b16 %v303, %v302
    %v323 = vpack.c.b16 %v305, %v304
    %v324 = vpack.c.b16 %v307, %v306
    %v325 = vpack.c.b16 %v309, %v308
    %342 = vmatpush.bf16.msra.mxu0 %v317
    %343 = vmatpush.bf16.msra.mxu0 %v316
    %344 = vmatpush.bf16.msra.mxu0 %v315
    %345 = vmatpush.bf16.msra.mxu0 %v314
    %346 = vmatpush.bf16.msra.mxu0 %v313
    %347 = vmatpush.bf16.msra.mxu0 %v312
    %348 = vmatpush.bf16.msra.mxu0 %v311
    %349 = vmatpush.bf16.msra.mxu0 %v310
    %350 = vmatmul.bf16.gmra.mxu0 %v208
    %v351 = vpop.f32.mrf.mxu0
    %v352 = vadd.f32 %v244, %v351
    %v353 = vpop.f32.mrf.mxu0
    %v354 = vadd.f32 %v244, %v353
    %355 = vdwg.mxu0
    %356 = vmatpush.bf16.msra.mxu0 %v325
    %357 = vmatpush.bf16.msra.mxu0 %v324
    %358 = vmatpush.bf16.msra.mxu0 %v323
    %359 = vmatpush.bf16.msra.mxu0 %v322
    %360 = vmatpush.bf16.msra.mxu0 %v321
    %361 = vmatpush.bf16.msra.mxu0 %v320
    %362 = vmatpush.bf16.msra.mxu0 %v319
    %363 = vmatpush.bf16.msra.mxu0 %v318
    %364 = vmatmul.bf16.gmra.mxu0 %v209
    %v365 = vpop.f32.mrf.mxu0
    %v366 = vadd.f32 %v352, %v365
    %v367 = vpop.f32.mrf.mxu0
    %v368 = vadd.f32 %v354, %v367
    %369 = vdwg.mxu0
    %370 = vst [vmem:[#allocation11] sm:$0xff] %v366
    %371 = vst [vmem:[#allocation11 + $0x8] sm:$0xff] %v368
    %v372 = vlaneseq
    %v373 = vand.u32 %v372, 127
    %vm374 = vcmp.lt.s32.totalorder %v373, 4
    %v375 = vsel %vm374, %v366, -1e+30
    %v376 = vsel %vm374, %v368, -1e+30
    %377 = vmax.xlane.f32.xlu0 %v375
    %v378 = vpop.xlane.xlu0 %377
    %379 = vmax.xlane.f32.xlu0 %v376
    %v380 = vpop.xlane.xlu0 %379
    %v381 = vsub.f32 %v375, %v378
    %v382 = vsub.f32 %v376, %v380
    %v383 = vmul.f32 %v381, 1.442695
    %v384 = vpow.pop %v383
    %v385 = vmul.f32 %v382, 1.442695
    %v386 = vpow.pop %v385
    %387 = vadd.xlane.f32.xlu0 %v384
    %v388 = vpop.xlane.xlu0 %387
    %389 = vadd.xlane.f32.xlu0 %v386
    %v390 = vpop.xlane.xlu0 %389
    %v391 = vlog2.pop %v388
    %v392 = vmul.f32 %v391, 0.6931472
    %v393 = vlog2.pop %v390
    %v394 = vmul.f32 %v393, 0.6931472
    %v395 = vadd.f32 %v378, %v392
    %v396 = vadd.f32 %v380, %v394
    %v397 = vld [vmem:[%s7] sm:$0xff]
    %v398 = vld [vmem:[%s7 + $0x8] sm:$0xff]
    %399 = vset.pattern.permute.xlu0 0
    %400 = vperm.xlu0 %399, %v397
    %v401 = vpop.permute.xlu0 %400
    %402 = vset.pattern.permute.xlu0 0
    %403 = vperm.xlu0 %402, %v398
    %v404 = vpop.permute.xlu0 %403
    %vm405 = vcmp.eq.s32.totalorder %v373, %v401
    %vm406 = vcmp.eq.s32.totalorder %v373, %v404
    %v407 = vsel %vm405, %v366, 0.0
    %v408 = vsel %vm406, %v368, 0.0
    %409 = vadd.xlane.f32.xlu0 %v407
    %v410 = vpop.xlane.xlu0 %409
    %411 = vadd.xlane.f32.xlu0 %v408
    %v412 = vpop.xlane.xlu0 %411
    %vm413 = vcmp.ge.s32.totalorder %v397, 0
    %vm414 = vcmp.ge.s32.totalorder %v398, 0
    %v415 = vsub.f32 %v395, %v410
    %v416 = vsub.f32 %v396, %v412
    %v417 = vsel %vm413, %v415, 0.0
    %v418 = vsel %vm414, %v416, 0.0
    %vm419 = vcmask 7168
    %v420 = vsel %vm419, %v417, 0.0
    %v421 = vsel %vm419, %v418, 0.0
    %v422 = vadd.f32 %v420, %v421
    %423 = vadd.xlane.f32.xlu0 %v422
    %v424 = vpop.xlane.xlu0 %423
    %v425 = vrot.slane %v424, 4
    %v426 = vadd.f32 %v424, %v425
    %v427 = vrot.slane %v426, 2
    %v428 = vadd.f32 %v426, %v427
    %v429 = vrot.slane %v428, 1
    %v430 = vadd.f32 %v428, %v429
    %s431 = vtos %v430
    %s432 = scalar_lea.smem [#allocation12], 0
    %433 = sst [smem:[%s432]] %s431
    // Predicated region
    $region50: #{tpu_custom_call.1} parent=1 // pred_check
      _
    $region51: #{tpu_custom_call.1} parent=1 // pred_check_branch
      %435 = sbr.rel (0) target = $region53
    $region52: #{tpu_custom_call.1} parent=1 // pred_region
      %437 = vsyncadd [#allocation4], 0
      %s438 = sshll.u32 [#allocation11], 4
      %s439 = int_to_ptr.vmem [resolvable:$true] %s438
      %s440 = sshll.u32 %s8, 4
      %s441 = int_to_ptr.hbm [resolvable:$true] %s440
      %446 = dma.vmem_to_hbm [thread:$0]  %s439, 256, %s441, [#allocation4], 128, 128, 8
    $region53: #{tpu_custom_call.1} parent=1 // pred_fallthru
      _
    // Predicated region
    $region54: #{tpu_custom_call.1} parent=1 // pred_check
      _
    $region55: #{tpu_custom_call.1} parent=1 // pred_check_branch
      %448 = sbr.rel (0) target = $region57
    $region56: #{tpu_custom_call.1} parent=1 // pred_region
      %450 = vsyncadd [#allocation5], 0
      %s452 = sshll.u32 %s9, 4
      %s453 = int_to_ptr.hbm [resolvable:$true] %s452
      %455 = dma.smem_to_hbm [#allocation12], 16, %s453, [#allocation5]
    $region57: #{tpu_custom_call.1} parent=1 // pred_fallthru
      _
    // Predicated region
    $region58: #{tpu_custom_call.1} parent=1 // pred_check
      _
    $region59: #{tpu_custom_call.1} parent=1 // pred_check_branch
      %457 = sbr.rel (0) target = $region61
    $region60: #{tpu_custom_call.1} parent=1 // pred_region
      %459 = dma.done [#allocation4], 256
    $region61: #{tpu_custom_call.1} parent=1 // pred_fallthru
      _
    // Predicated region
    $region62: #{tpu_custom_call.1} parent=1 // pred_check
      _
    $region63: #{tpu_custom_call.1} parent=1 // pred_check_branch
      %461 = sbr.rel (0) target = $region65
    $region64: #{tpu_custom_call.1} parent=1 // pred_region
      %463 = dma.done [#allocation5], 16
    $region65: #{tpu_custom_call.1} parent=1 // pred_fallthru
      _
    %464 = sfence
    %465 = vsyncpa [#allocation3], 1
    %466 = vsyncpa [#allocation7], 1
    %467 = vsyncpa [#allocation10], 1
    %468 = vsyncpa [#allocation4], 1
    %469 = vsyncpa [#allocation5], 1

</llo_original>
